<compile_context>
chip_gen: v5e
topology: v5e:2x2
jax: 0.10.0
libtpu: 0.0.40
codegen_flags: <defaults>
</compile_context>

<pallas_src>
import functools

import jax
import jax.numpy as jnp
from jax.experimental import pallas as pl
from jax.experimental.pallas import tpu as pltpu

BN_EPS = 1e-5


def _round_up(x, m):
    return (x + m - 1) // m * m


def _pick_row_tile(m):
    """Largest 'nice' row tile dividing m (avoids padding); fallback pads."""
    for t in (1024, 512, 256, 128, 64, 32, 16, 8):
        if m % t == 0:
            return t, m
    t = 256
    return t, _round_up(m, t)


def _vmem_limit(*byte_counts):
    total = int(sum(byte_counts))
    # Explicit scoped-VMEM request from the real footprint (2x headroom),
    # clamped to the v7x physical budget so the same code runs on all gens.
    return int(min(64 * 1024 * 1024, max(32 * 1024 * 1024, 2 * total)))


# ---------------------------------------------------------------------------
# Kernel 1: one MXU matmul per row tile (K = k*k*Cin) + partial BN statistics
# ---------------------------------------------------------------------------
def _conv_stats_kernel(x_ref, w_ref, y_ref, s_ref):
    """
    x_ref : (TM, k*k*Cin) bf16   patch-matrix row tile
    w_ref : (k*k*Cin, Cp) bf16   K-folded weights (Cout padded to Cp lanes)
    y_ref : (TM, Cp)      bf16   pre-BN activations
    s_ref : (1, 8, Cp)    f32    row 0 = partial sum, row 1 = partial sum-of-sq
    """
    acc = jnp.dot(x_ref[...], w_ref[...], preferred_element_type=jnp.float32)
    yb = acc.astype(y_ref.dtype)
    y_ref[...] = yb                                # single lane-dense store
    a32 = yb.astype(jnp.float32)                   # stats of the data pass 2 normalizes
    s_sum = jnp.sum(a32, axis=0, keepdims=True)    # (1, Cp)
    s_sq = jnp.sum(a32 * a32, axis=0, keepdims=True)
    rows = jax.lax.broadcasted_iota(jnp.int32, (8, a32.shape[-1]), 0)
    # One full unmasked (8, Cp) store instead of zero-fill + two 1-sublane writes.
    s_ref[0] = jnp.where(rows == 0, s_sum, jnp.where(rows == 1, s_sq, 0.0))


# ---------------------------------------------------------------------------
# Kernel 2: folded BatchNorm (per-channel scale/shift) + ReLU epilogue
# ---------------------------------------------------------------------------
def _bn_relu_kernel(y_ref, scale_ref, shift_ref, o_ref):
    y = y_ref[...].astype(jnp.float32) * scale_ref[...] + shift_ref[...]
    o_ref[...] = jnp.maximum(y, 0.0)


# ---------------------------------------------------------------------------
# BaseConv forward: Conv2d(k, stride, pad=(k-1)//2, groups=1, bias=False)
#                   -> BatchNorm2d (train-mode batch stats) -> ReLU
# ---------------------------------------------------------------------------
def base_conv_forward(x, w, gamma, beta, *, stride, eps=BN_EPS):
    B, Cin, H, W = x.shape
    Cout, Cin_w, kh_, kw_ = w.shape
    assert Cin_w == Cin and kh_ == kw_, "groups=1 conv expected"
    k, s = kh_, stride
    p = (k - 1) // 2
    Ho = (H + 2 * p - k) // s + 1
    Wo = (W + 2 * p - k) // s + 1
    Cp = _round_up(Cout, 128)                     # lane-dense output channels
    KKC = k * k * Cin                             # folded contraction dim
    M = B * Ho * Wo

    # ---- wrapper-side K-folded patch matrix (bf16, built once) ------------
    x_nhwc = jnp.transpose(x, (0, 2, 3, 1)).astype(jnp.bfloat16)
    xp = jnp.pad(x_nhwc, ((0, 0), (p, p), (p, p), (0, 0)))
    taps = []
    for kh in range(k):                           # column order = (kh, kw, cin)
        for kw in range(k):
            taps.append(xp[:, kh:kh + (Ho - 1) * s + 1:s,
                            kw:kw + (Wo - 1) * s + 1:s, :])
    patches = jnp.concatenate(taps, axis=-1).reshape(M, KKC)

    wk = jnp.pad(w, ((0, Cp - Cout), (0, 0), (0, 0), (0, 0)))    # (Cp,Cin,k,k)
    wk = jnp.transpose(wk, (2, 3, 1, 0)).reshape(KKC, Cp).astype(jnp.bfloat16)

    TM, Mp = _pick_row_tile(M)
    if Mp != M:                                   # zero rows are BN-stat neutral
        patches = jnp.pad(patches, ((0, Mp - M), (0, 0)))
    n_tiles = Mp // TM

    # ---- pass 1: conv matmul + per-tile partial BN stats -------------------
    conv_out, stats = pl.pallas_call(
        _conv_stats_kernel,
        out_shape=(jax.ShapeDtypeStruct((Mp, Cp), jnp.bfloat16),
                   jax.ShapeDtypeStruct((n_tiles, 8, Cp), jnp.float32)),
        grid_spec=pltpu.PrefetchScalarGridSpec(
            num_scalar_prefetch=0,
            grid=(n_tiles,),
            in_specs=[
                pl.BlockSpec((TM, KKC), lambda i: (i, 0)),
                pl.BlockSpec((KKC, Cp), lambda i: (0, 0)),
            ],
            out_specs=[
                pl.BlockSpec((TM, Cp), lambda i: (i, 0)),
                pl.BlockSpec((1, 8, Cp), lambda i: (i, 0, 0)),
            ],
        ),
        compiler_params=pltpu.CompilerParams(
            dimension_semantics=("parallel",),
            vmem_limit_bytes=_vmem_limit(
                2 * TM * KKC * 2,      # double-buffered patch tile (bf16)
                2 * KKC * Cp * 2,      # double-buffered weights (bf16)
                2 * TM * Cp * 2,       # double-buffered y tile (bf16)
                2 * 8 * Cp * 4,        # double-buffered stats tile (f32)
                2 * TM * Cp * 4)),     # f32 accumulator / cast intermediates
    )(patches, wk)

    # ---- fold train-mode BatchNorm into per-channel scale / shift ----------
    # NOTE: E[x^2] - mean^2 is cancellation-prone when |mean| >> std; fine at
    # bf16-activation accuracy, use a Welford-style merge for production BN.
    cnt = float(M)
    mean = jnp.sum(stats[:, 0, :], axis=0) / cnt
    var = jnp.maximum(jnp.sum(stats[:, 1, :], axis=0) / cnt - mean * mean, 0.0)
    gamma_p = jnp.pad(gamma.astype(jnp.float32), (0, Cp - Cout), constant_values=1.0)
    beta_p = jnp.pad(beta.astype(jnp.float32), (0, Cp - Cout))
    scale = gamma_p * jax.lax.rsqrt(var + eps)
    shift = beta_p - mean * scale

    # ---- pass 2: fused (folded-BN) affine + ReLU ----------------------------
    out2d = pl.pallas_call(
        _bn_relu_kernel,
        out_shape=jax.ShapeDtypeStruct((Mp, Cp), jnp.float32),
        grid_spec=pltpu.PrefetchScalarGridSpec(
            num_scalar_prefetch=0,
            grid=(n_tiles,),
            in_specs=[
                pl.BlockSpec((TM, Cp), lambda i: (i, 0)),
                pl.BlockSpec((1, Cp), lambda i: (0, 0)),
                pl.BlockSpec((1, Cp), lambda i: (0, 0)),
            ],
            out_specs=pl.BlockSpec((TM, Cp), lambda i: (i, 0)),
        ),
        compiler_params=pltpu.CompilerParams(
            dimension_semantics=("parallel",),
            vmem_limit_bytes=_vmem_limit(
                2 * TM * Cp * 2,       # double-buffered bf16 input tile
                4 * Cp * 4,            # scale / shift
                2 * TM * Cp * 4,       # double-buffered f32 output tile
                TM * Cp * 4)),         # f32 temp
    )(conv_out, scale.reshape(1, Cp), shift.reshape(1, Cp))

    out = out2d[:M, :Cout].reshape(B, Ho, Wo, Cout)
    return jnp.transpose(out, (0, 3, 1, 2))       # back to NCHW at the boundary


# ---------------------------------------------------------------------------
# Pure-JAX reference (f32, highest precision) for correctness checking
# ---------------------------------------------------------------------------
def _base_conv_reference(x, w, gamma, beta, stride, eps=BN_EPS):
    k = w.shape[-1]
    p = (k - 1) // 2
    y = jax.lax.conv_general_dilated(
        x, w, window_strides=(stride, stride), padding=[(p, p), (p, p)],
        dimension_numbers=("NCHW", "OIHW", "NCHW"),
        precision=jax.lax.Precision.HIGHEST)
    mean = jnp.mean(y, axis=(0, 2, 3), keepdims=True)
    var = jnp.mean(jnp.square(y - mean), axis=(0, 2, 3), keepdims=True)
    yn = (y - mean) * jax.lax.rsqrt(var + eps)
    return jnp.maximum(yn * gamma[None, :, None, None] + beta[None, :, None, None], 0.0)


def _check_case(key, x, cout, ksize, stride):
    kw_, kg, kb = jax.random.split(key, 3)
    cin = x.shape[1]
    fan_in = cin * ksize * ksize
    w = jax.random.normal(kw_, (cout, cin, ksize, ksize), jnp.float32) * (2.0 / fan_in) ** 0.5
    gamma = 1.0 + 0.1 * jax.random.normal(kg, (cout,), jnp.float32)
    beta = 0.1 * jax.random.normal(kb, (cout,), jnp.float32)

    fwd = jax.jit(functools.partial(base_conv_forward, stride=stride))
    out = fwd(x, w, gamma, beta)
    jax.block_until_ready(out)

    ref = _base_conv_reference(x, w, gamma, beta, stride)
    assert out.shape == ref.shape, (out.shape, ref.shape)
    err = float(jnp.max(jnp.abs(out - ref)))
    assert err < 1e-1, f"max abs error too large: {err}"
    return out


if __name__ == "__main__":
    root = jax.random.PRNGKey(0)
    kx1, kx2, kc1, kc2 = jax.random.split(root, 4)

    # BaseConv(in=4, out=32, ksize=3, stride=1) on a (2, 4, 16, 16) input.
    x1 = jax.random.normal(kx1, (2, 4, 16, 16), jnp.float32)
    _check_case(kc1, x1, cout=32, ksize=3, stride=1)

    # BaseConv(in=4, out=48, ksize=3, stride=2) downsampling block on (2, 4, 32, 32).
    x2 = jax.random.normal(kx2, (2, 4, 32, 32), jnp.float32)
    _check_case(kc2, x2, cout=48, ksize=3, stride=2)

    print("KERNEL_OK")
</pallas_src>

<mosaic_0001>
module attributes {stable_mosaic.version = 11 : i64} {
  func.func @_conv_stats_kernel(%arg0: i32, %arg1: memref<512x36xbf16, #tpu.memory_space<vmem>>, %arg2: memref<36x128xbf16, #tpu.memory_space<vmem>>, %arg3: memref<512x128xbf16, #tpu.memory_space<vmem>>, %arg4: memref<1x8x128xf32, #tpu.memory_space<vmem>>) attributes {dimension_semantics = [#tpu.dimension_semantics<parallel>], iteration_bounds = array<i64: 1>, scalar_prefetch = 0 : i64, scratch_operands = 0 : i64, tpu.core_type = #tpu.core_type<tc>, window_params = [{transform_indices = @transform_0, window_bounds = array<i64: 512, 36>}, {pipeline_mode = #tpu.pipeline_mode<synchronous>, transform_indices = @transform_1, window_bounds = array<i64: 36, 128>}, {transform_indices = @transform_2, window_bounds = array<i64: 512, 128>}, {transform_indices = @transform_3, window_bounds = array<i64: 1, 8, 128>}]} {
    %c0 = arith.constant 0 : index
    %c0_0 = arith.constant 0 : index
    %0 = vector.load %arg1[%c0, %c0_0] : memref<512x36xbf16, #tpu.memory_space<vmem>>, vector<512x36xbf16>
    %c0_1 = arith.constant 0 : index
    %c0_2 = arith.constant 0 : index
    %1 = vector.load %arg2[%c0_1, %c0_2] : memref<36x128xbf16, #tpu.memory_space<vmem>>, vector<36x128xbf16>
    %cst = arith.constant dense<0.000000e+00> : vector<512x128xf32>
    %2 = tpu.matmul %0, %1, %cst {dimension_numbers = #tpu.dot_dimension_numbers<[1], [0], [0], [1], [0, 0, 1, 1], [], []>} : vector<512x36xbf16>, vector<36x128xbf16>, vector<512x128xf32> -> vector<512x128xf32>
    %3 = arith.truncf %2 : vector<512x128xf32> to vector<512x128xbf16>
    %c0_3 = arith.constant 0 : index
    %c0_4 = arith.constant 0 : index
    %4 = vector.load %arg3[%c0_3, %c0_4] : memref<512x128xbf16, #tpu.memory_space<vmem>>, vector<512x128xbf16>
    tpu.vector_store %arg3[%c0_3, %c0_4], %3 {strides = array<i32>} : memref<512x128xbf16, #tpu.memory_space<vmem>>, vector<512x128xbf16>,
    %5 = arith.extf %3 : vector<512x128xbf16> to vector<512x128xf32>
    %cst_5 = arith.constant dense<0.000000e+00> : vector<128xf32>
    %6 = vector.multi_reduction <add>, %5, %cst_5 [0] : vector<512x128xf32> to vector<128xf32>
    %7 = vector.shape_cast %6 : vector<128xf32> to vector<1x128xf32>
    %8 = arith.mulf %5, %5 : vector<512x128xf32>
    %cst_6 = arith.constant dense<0.000000e+00> : vector<128xf32>
    %9 = vector.multi_reduction <add>, %8, %cst_6 [0] : vector<512x128xf32> to vector<128xf32>
    %10 = vector.shape_cast %9 : vector<128xf32> to vector<1x128xf32>
    %11 = tpu.iota {dimensions = array<i32: 0>} : vector<8x128xi32>
    %c0_i32 = arith.constant 0 : i32
    %12 = vector.broadcast %c0_i32 : i32 to vector<8x128xi32>
    %13 = arith.cmpi eq, %11, %12 : vector<8x128xi32>
    %c1_i32 = arith.constant 1 : i32
    %14 = vector.broadcast %c1_i32 : i32 to vector<8x128xi32>
    %15 = arith.cmpi eq, %11, %14 : vector<8x128xi32>
    %cst_7 = arith.constant 0.000000e+00 : f32
    %16 = vector.shape_cast %10 : vector<1x128xf32> to vector<1x128xf32>
    %17 = vector.broadcast %16 : vector<1x128xf32> to vector<8x128xf32>
    %18 = vector.broadcast %cst_7 : f32 to vector<8x128xf32>
    %19 = arith.select %15, %17, %18 : vector<8x128xi1>, vector<8x128xf32>
    %20 = vector.shape_cast %7 : vector<1x128xf32> to vector<1x128xf32>
    %21 = vector.broadcast %20 : vector<1x128xf32> to vector<8x128xf32>
    %22 = arith.select %13, %21, %19 : vector<8x128xi1>, vector<8x128xf32>
    %c0_8 = arith.constant 0 : index
    %c0_9 = arith.constant 0 : index
    %c0_10 = arith.constant 0 : index
    %23 = vector.load %arg4[%c0_8, %c0_9, %c0_10] : memref<1x8x128xf32, #tpu.memory_space<vmem>>, vector<1x8x128xf32>
    %24 = vector.shape_cast %23 : vector<1x8x128xf32> to vector<8x128xf32>
    %25 = vector.shape_cast %22 : vector<8x128xf32> to vector<1x8x128xf32>
    tpu.vector_store %arg4[%c0_8, %c0_9, %c0_10], %25 {strides = array<i32>} : memref<1x8x128xf32, #tpu.memory_space<vmem>>, vector<1x8x128xf32>,
    return
  }
  func.func @transform_0(%arg0: i32) -> (i32, i32) {
    %c0_i32 = arith.constant 0 : i32
    %c0_i32_0 = arith.constant 0 : i32
    return %arg0, %c0_i32 : i32, i32
  }
  func.func @transform_1(%arg0: i32) -> (i32, i32) {
    %c0_i32 = arith.constant 0 : i32
    %c0_i32_0 = arith.constant 0 : i32
    %c0_i32_1 = arith.constant 0 : i32
    return %c0_i32, %c0_i32_0 : i32, i32
  }
  func.func @transform_2(%arg0: i32) -> (i32, i32) {
    %c0_i32 = arith.constant 0 : i32
    %c0_i32_0 = arith.constant 0 : i32
    return %arg0, %c0_i32 : i32, i32
  }
  func.func @transform_3(%arg0: i32) -> (i32, i32, i32) {
    %c0_i32 = arith.constant 0 : i32
    %c0_i32_0 = arith.constant 0 : i32
    %c0_i32_1 = arith.constant 0 : i32
    return %arg0, %c0_i32, %c0_i32_0 : i32, i32, i32
  }
}

module attributes {stable_mosaic.version = 11 : i64} {
  func.func @_bn_relu_kernel(%arg0: i32, %arg1: memref<512x128xbf16, #tpu.memory_space<vmem>>, %arg2: memref<1x128xf32, #tpu.memory_space<vmem>>, %arg3: memref<1x128xf32, #tpu.memory_space<vmem>>, %arg4: memref<512x128xf32, #tpu.memory_space<vmem>>) attributes {dimension_semantics = [#tpu.dimension_semantics<parallel>], iteration_bounds = array<i64: 1>, scalar_prefetch = 0 : i64, scratch_operands = 0 : i64, tpu.core_type = #tpu.core_type<tc>, window_params = [{transform_indices = @transform_0, window_bounds = array<i64: 512, 128>}, {pipeline_mode = #tpu.pipeline_mode<synchronous>, transform_indices = @transform_1, window_bounds = array<i64: 1, 128>}, {pipeline_mode = #tpu.pipeline_mode<synchronous>, transform_indices = @transform_2, window_bounds = array<i64: 1, 128>}, {transform_indices = @transform_3, window_bounds = array<i64: 512, 128>}]} {
    %c0 = arith.constant 0 : index
    %c0_0 = arith.constant 0 : index
    %0 = vector.load %arg1[%c0, %c0_0] : memref<512x128xbf16, #tpu.memory_space<vmem>>, vector<512x128xbf16>
    %1 = arith.extf %0 : vector<512x128xbf16> to vector<512x128xf32>
    %c0_1 = arith.constant 0 : index
    %c0_2 = arith.constant 0 : index
    %2 = vector.load %arg2[%c0_1, %c0_2] : memref<1x128xf32, #tpu.memory_space<vmem>>, vector<1x128xf32>
    %3 = vector.broadcast %2 : vector<1x128xf32> to vector<512x128xf32>
    %4 = arith.mulf %1, %3 : vector<512x128xf32>
    %c0_3 = arith.constant 0 : index
    %c0_4 = arith.constant 0 : index
    %5 = vector.load %arg3[%c0_3, %c0_4] : memref<1x128xf32, #tpu.memory_space<vmem>>, vector<1x128xf32>
    %6 = vector.broadcast %5 : vector<1x128xf32> to vector<512x128xf32>
    %7 = arith.addf %4, %6 : vector<512x128xf32>
    %cst = arith.constant 0.000000e+00 : f32
    %8 = vector.broadcast %cst : f32 to vector<512x128xf32>
    %9 = arith.maximumf %7, %8 : vector<512x128xf32>
    %c0_5 = arith.constant 0 : index
    %c0_6 = arith.constant 0 : index
    %10 = vector.load %arg4[%c0_5, %c0_6] : memref<512x128xf32, #tpu.memory_space<vmem>>, vector<512x128xf32>
    tpu.vector_store %arg4[%c0_5, %c0_6], %9 {strides = array<i32>} : memref<512x128xf32, #tpu.memory_space<vmem>>, vector<512x128xf32>,
    return
  }
  func.func @transform_0(%arg0: i32) -> (i32, i32) {
    %c0_i32 = arith.constant 0 : i32
    %c0_i32_0 = arith.constant 0 : i32
    return %arg0, %c0_i32 : i32, i32
  }
  func.func @transform_1(%arg0: i32) -> (i32, i32) {
    %c0_i32 = arith.constant 0 : i32
    %c0_i32_0 = arith.constant 0 : i32
    %c0_i32_1 = arith.constant 0 : i32
    return %c0_i32, %c0_i32_0 : i32, i32
  }
  func.func @transform_2(%arg0: i32) -> (i32, i32) {
    %c0_i32 = arith.constant 0 : i32
    %c0_i32_0 = arith.constant 0 : i32
    %c0_i32_1 = arith.constant 0 : i32
    return %c0_i32, %c0_i32_0 : i32, i32
  }
  func.func @transform_3(%arg0: i32) -> (i32, i32) {
    %c0_i32 = arith.constant 0 : i32
    %c0_i32_0 = arith.constant 0 : i32
    return %arg0, %c0_i32 : i32, i32
  }
}

</mosaic_0001>

<llo_original>
// kernel: base_conv_forward.3
$region0: #{base_conv_forward.3}
  #allocation0 [shape = 'u32[]', space=smem, size = 0x4, offset = 0x4, fixed_abs, tag = 'smem constant byte address 0x4 - core index']
  #allocation1 [shape = 'u32[72,128]{1,0:T(1,128)}', space=vmem, size = 0x9000, scoped, tag = 'internal scratch']
  %s0 = inlined_call_operand.vmem [shape: bf16[512,128], index: 0, kind: input, shape index: {}]
  %s1 = inlined_call_operand.vmem [shape: f32[1,128], index: 1, kind: input, shape index: {}]
  %s2 = inlined_call_operand.vmem [shape: f32[1,128], index: 2, kind: input, shape index: {}]
  %s3 = inlined_call_operand.hbm [shape: f32[512,128], index: 3, kind: output, shape index: {}]
  %s4 = sld [smem:[#allocation0]]
  $region22: #{base_conv_forward.3} parent=0
    _
  %s6 = ssub.s32 1, %s4
  %s7 = scalar_select 0, %s6, %s4
  $region1: #{base_conv_forward.3} parent=0
    #allocation2 [shape = 'u8[262144]{0}', space=vmem, size = 0x40000, scoped, tag = 'output window, operand 0, single buffered']
    #allocation3 [shape = 's32[1]{0}', space=sflag, size = 0x4, scoped, tag = 'scoped memory for base_conv_forward.3']
    %8 = vsyncpa [#allocation3], 0
    // Predicated region
    $region2: #{base_conv_forward.3} parent=1 // pred_check
      _
    $region3: #{base_conv_forward.3} parent=1 // pred_check_branch
      %10 = sbr.rel (0) target = $region5
    $region4: #{base_conv_forward.3} parent=1 // pred_region
      _
    $region5: #{base_conv_forward.3} parent=1 // pred_fallthru
      _
    // Predicated region
    $region6: #{base_conv_forward.3} parent=1 // pred_check
      _
    $region7: #{base_conv_forward.3} parent=1 // pred_check_branch
      %12 = sbr.rel (0) target = $region9
    $region8: #{base_conv_forward.3} parent=1 // pred_region
      _
    $region9: #{base_conv_forward.3} parent=1 // pred_fallthru
      _
    // Predicated region
    $region10: #{base_conv_forward.3} parent=1 // pred_check
      _
    $region11: #{base_conv_forward.3} parent=1 // pred_check_branch
      %14 = sbr.rel (0) target = $region13
    $region12: #{base_conv_forward.3} parent=1 // pred_region
      _
    $region13: #{base_conv_forward.3} parent=1 // pred_fallthru
      _
    %v15 = vld [vmem:[%s0] sm:$0xf]
    %v16 = vld [vmem:[%s0 + $0x4] sm:$0xf]
    %v17 = vld [vmem:[%s0 + $0x8] sm:$0xf]
    %v18 = vld [vmem:[%s0 + $0xc] sm:$0xf]
    %v19 = vld [vmem:[%s0 + $0x10] sm:$0xf]
    %v20 = vld [vmem:[%s0 + $0x14] sm:$0xf]
    %v21 = vld [vmem:[%s0 + $0x18] sm:$0xf]
    %v22 = vld [vmem:[%s0 + $0x1c] sm:$0xf]
    %v23 = vld [vmem:[%s0 + $0x20] sm:$0xf]
    %v24 = vld [vmem:[%s0 + $0x24] sm:$0xf]
    %v25 = vld [vmem:[%s0 + $0x28] sm:$0xf]
    %v26 = vld [vmem:[%s0 + $0x2c] sm:$0xf]
    %v27 = vld [vmem:[%s0 + $0x30] sm:$0xf]
    %v28 = vld [vmem:[%s0 + $0x34] sm:$0xf]
    %v29 = vld [vmem:[%s0 + $0x38] sm:$0xf]
    %v30 = vld [vmem:[%s0 + $0x3c] sm:$0xf]
    %v31 = vld [vmem:[%s0 + $0x40] sm:$0xf]
    %v32 = vld [vmem:[%s0 + $0x44] sm:$0xf]
    %v33 = vld [vmem:[%s0 + $0x48] sm:$0xf]
    %v34 = vld [vmem:[%s0 + $0x4c] sm:$0xf]
    %v35 = vld [vmem:[%s0 + $0x50] sm:$0xf]
    %v36 = vld [vmem:[%s0 + $0x54] sm:$0xf]
    %v37 = vld [vmem:[%s0 + $0x58] sm:$0xf]
    %v38 = vld [vmem:[%s0 + $0x5c] sm:$0xf]
    %v39 = vld [vmem:[%s0 + $0x60] sm:$0xf]
    %v40 = vld [vmem:[%s0 + $0x64] sm:$0xf]
    %v41 = vld [vmem:[%s0 + $0x68] sm:$0xf]
    %v42 = vld [vmem:[%s0 + $0x6c] sm:$0xf]
    %v43 = vld [vmem:[%s0 + $0x70] sm:$0xf]
    %v44 = vld [vmem:[%s0 + $0x74] sm:$0xf]
    %v45 = vld [vmem:[%s0 + $0x78] sm:$0xf]
    %v46 = vld [vmem:[%s0 + $0x7c] sm:$0xf]
    %v47 = vld [vmem:[%s0 + $0x80] sm:$0xf]
    %v48 = vld [vmem:[%s0 + $0x84] sm:$0xf]
    %v49 = vld [vmem:[%s0 + $0x88] sm:$0xf]
    %v50 = vld [vmem:[%s0 + $0x8c] sm:$0xf]
    %v51 = vld [vmem:[%s0 + $0x90] sm:$0xf]
    %v52 = vld [vmem:[%s0 + $0x94] sm:$0xf]
    %v53 = vld [vmem:[%s0 + $0x98] sm:$0xf]
    %v54 = vld [vmem:[%s0 + $0x9c] sm:$0xf]
    %v55 = vld [vmem:[%s0 + $0xa0] sm:$0xf]
    %v56 = vld [vmem:[%s0 + $0xa4] sm:$0xf]
    %v57 = vld [vmem:[%s0 + $0xa8] sm:$0xf]
    %v58 = vld [vmem:[%s0 + $0xac] sm:$0xf]
    %v59 = vld [vmem:[%s0 + $0xb0] sm:$0xf]
    %v60 = vld [vmem:[%s0 + $0xb4] sm:$0xf]
    %v61 = vld [vmem:[%s0 + $0xb8] sm:$0xf]
    %v62 = vld [vmem:[%s0 + $0xbc] sm:$0xf]
    %v63 = vld [vmem:[%s0 + $0xc0] sm:$0xf]
    %v64 = vld [vmem:[%s0 + $0xc4] sm:$0xf]
    %v65 = vld [vmem:[%s0 + $0xc8] sm:$0xf]
    %v66 = vld [vmem:[%s0 + $0xcc] sm:$0xf]
    %v67 = vld [vmem:[%s0 + $0xd0] sm:$0xf]
    %v68 = vld [vmem:[%s0 + $0xd4] sm:$0xf]
    %v69 = vld [vmem:[%s0 + $0xd8] sm:$0xf]
    %v70 = vld [vmem:[%s0 + $0xdc] sm:$0xf]
    %v71 = vld [vmem:[%s0 + $0xe0] sm:$0xf]
    %v72 = vld [vmem:[%s0 + $0xe4] sm:$0xf]
    %v73 = vld [vmem:[%s0 + $0xe8] sm:$0xf]
    %v74 = vld [vmem:[%s0 + $0xec] sm:$0xf]
    %v75 = vld [vmem:[%s0 + $0xf0] sm:$0xf]
    %v76 = vld [vmem:[%s0 + $0xf4] sm:$0xf]
    %v77 = vld [vmem:[%s0 + $0xf8] sm:$0xf]
    %v78 = vld [vmem:[%s0 + $0xfc] sm:$0xf]
    %v79 = vunpack.c.l.bf16 %v15
    %v80 = vunpack.c.l.bf16 %v16
    %v81 = vunpack.c.l.bf16 %v17
    %v82 = vunpack.c.l.bf16 %v18
    %v83 = vunpack.c.l.bf16 %v19
    %v84 = vunpack.c.l.bf16 %v20
    %v85 = vunpack.c.l.bf16 %v21
    %v86 = vunpack.c.l.bf16 %v22
    %v87 = vunpack.c.l.bf16 %v23
    %v88 = vunpack.c.l.bf16 %v24
    %v89 = vunpack.c.l.bf16 %v25
    %v90 = vunpack.c.l.bf16 %v26
    %v91 = vunpack.c.l.bf16 %v27
    %v92 = vunpack.c.l.bf16 %v28
    %v93 = vunpack.c.l.bf16 %v29
    %v94 = vunpack.c.l.bf16 %v30
    %v95 = vunpack.c.l.bf16 %v31
    %v96 = vunpack.c.l.bf16 %v32
    %v97 = vunpack.c.l.bf16 %v33
    %v98 = vunpack.c.l.bf16 %v34
    %v99 = vunpack.c.l.bf16 %v35
    %v100 = vunpack.c.l.bf16 %v36
    %v101 = vunpack.c.l.bf16 %v37
    %v102 = vunpack.c.l.bf16 %v38
    %v103 = vunpack.c.l.bf16 %v39
    %v104 = vunpack.c.l.bf16 %v40
    %v105 = vunpack.c.l.bf16 %v41
    %v106 = vunpack.c.l.bf16 %v42
    %v107 = vunpack.c.l.bf16 %v43
    %v108 = vunpack.c.l.bf16 %v44
    %v109 = vunpack.c.l.bf16 %v45
    %v110 = vunpack.c.l.bf16 %v46
    %v111 = vunpack.c.l.bf16 %v47
    %v112 = vunpack.c.l.bf16 %v48
    %v113 = vunpack.c.l.bf16 %v49
    %v114 = vunpack.c.l.bf16 %v50
    %v115 = vunpack.c.l.bf16 %v51
    %v116 = vunpack.c.l.bf16 %v52
    %v117 = vunpack.c.l.bf16 %v53
    %v118 = vunpack.c.l.bf16 %v54
    %v119 = vunpack.c.l.bf16 %v55
    %v120 = vunpack.c.l.bf16 %v56
    %v121 = vunpack.c.l.bf16 %v57
    %v122 = vunpack.c.l.bf16 %v58
    %v123 = vunpack.c.l.bf16 %v59
    %v124 = vunpack.c.l.bf16 %v60
    %v125 = vunpack.c.l.bf16 %v61
    %v126 = vunpack.c.l.bf16 %v62
    %v127 = vunpack.c.l.bf16 %v63
    %v128 = vunpack.c.l.bf16 %v64
    %v129 = vunpack.c.l.bf16 %v65
    %v130 = vunpack.c.l.bf16 %v66
    %v131 = vunpack.c.l.bf16 %v67
    %v132 = vunpack.c.l.bf16 %v68
    %v133 = vunpack.c.l.bf16 %v69
    %v134 = vunpack.c.l.bf16 %v70
    %v135 = vunpack.c.l.bf16 %v71
    %v136 = vunpack.c.l.bf16 %v72
    %v137 = vunpack.c.l.bf16 %v73
    %v138 = vunpack.c.l.bf16 %v74
    %v139 = vunpack.c.l.bf16 %v75
    %v140 = vunpack.c.l.bf16 %v76
    %v141 = vunpack.c.l.bf16 %v77
    %v142 = vunpack.c.l.bf16 %v78
    %v143 = vld [vmem:[%s1] sm:$0x1]
    %v145 = vperm.slane %v143, 0
    %v147 = vmul.f32 %v79, %v145
    %v148 = vmul.f32 %v80, %v145
    %v149 = vmul.f32 %v81, %v145
    %v150 = vmul.f32 %v82, %v145
    %v151 = vmul.f32 %v83, %v145
    %v152 = vmul.f32 %v84, %v145
    %v153 = vmul.f32 %v85, %v145
    %v154 = vmul.f32 %v86, %v145
    %v155 = vmul.f32 %v87, %v145
    %v156 = vmul.f32 %v88, %v145
    %v157 = vmul.f32 %v89, %v145
    %v158 = vmul.f32 %v90, %v145
    %v159 = vmul.f32 %v91, %v145
    %v160 = vmul.f32 %v92, %v145
    %v161 = vmul.f32 %v93, %v145
    %v162 = vmul.f32 %v94, %v145
    %v163 = vmul.f32 %v95, %v145
    %v164 = vmul.f32 %v96, %v145
    %v165 = vmul.f32 %v97, %v145
    %v166 = vmul.f32 %v98, %v145
    %v167 = vmul.f32 %v99, %v145
    %v168 = vmul.f32 %v100, %v145
    %v169 = vmul.f32 %v101, %v145
    %v170 = vmul.f32 %v102, %v145
    %v171 = vmul.f32 %v103, %v145
    %v172 = vmul.f32 %v104, %v145
    %v173 = vmul.f32 %v105, %v145
    %v174 = vmul.f32 %v106, %v145
    %v175 = vmul.f32 %v107, %v145
    %v176 = vmul.f32 %v108, %v145
    %v177 = vmul.f32 %v109, %v145
    %v178 = vmul.f32 %v110, %v145
    %v179 = vmul.f32 %v111, %v145
    %v180 = vmul.f32 %v112, %v145
    %v181 = vmul.f32 %v113, %v145
    %v182 = vmul.f32 %v114, %v145
    %v183 = vmul.f32 %v115, %v145
    %v184 = vmul.f32 %v116, %v145
    %v185 = vmul.f32 %v117, %v145
    %v186 = vmul.f32 %v118, %v145
    %v187 = vmul.f32 %v119, %v145
    %v188 = vmul.f32 %v120, %v145
    %v189 = vmul.f32 %v121, %v145
    %v190 = vmul.f32 %v122, %v145
    %v191 = vmul.f32 %v123, %v145
    %v192 = vmul.f32 %v124, %v145
    %v193 = vmul.f32 %v125, %v145
    %v194 = vmul.f32 %v126, %v145
    %v195 = vmul.f32 %v127, %v145
    %v196 = vmul.f32 %v128, %v145
    %v197 = vmul.f32 %v129, %v145
    %v198 = vmul.f32 %v130, %v145
    %v199 = vmul.f32 %v131, %v145
    %v200 = vmul.f32 %v132, %v145
    %v201 = vmul.f32 %v133, %v145
    %v202 = vmul.f32 %v134, %v145
    %v203 = vmul.f32 %v135, %v145
    %v204 = vmul.f32 %v136, %v145
    %v205 = vmul.f32 %v137, %v145
    %v206 = vmul.f32 %v138, %v145
    %v207 = vmul.f32 %v139, %v145
    %v208 = vmul.f32 %v140, %v145
    %v209 = vmul.f32 %v141, %v145
    %v210 = vmul.f32 %v142, %v145
    %v211 = vld [vmem:[%s2] sm:$0x1]
    %v213 = vperm.slane %v211, 0
    %v215 = vadd.f32 %v147, %v213
    %v216 = vadd.f32 %v148, %v213
    %v217 = vadd.f32 %v149, %v213
    %v218 = vadd.f32 %v150, %v213
    %v219 = vadd.f32 %v151, %v213
    %v220 = vadd.f32 %v152, %v213
    %v221 = vadd.f32 %v153, %v213
    %v222 = vadd.f32 %v154, %v213
    %v223 = vadd.f32 %v155, %v213
    %v224 = vadd.f32 %v156, %v213
    %v225 = vadd.f32 %v157, %v213
    %v226 = vadd.f32 %v158, %v213
    %v227 = vadd.f32 %v159, %v213
    %v228 = vadd.f32 %v160, %v213
    %v229 = vadd.f32 %v161, %v213
    %v230 = vadd.f32 %v162, %v213
    %v231 = vadd.f32 %v163, %v213
    %v232 = vadd.f32 %v164, %v213
    %v233 = vadd.f32 %v165, %v213
    %v234 = vadd.f32 %v166, %v213
    %v235 = vadd.f32 %v167, %v213
    %v236 = vadd.f32 %v168, %v213
    %v237 = vadd.f32 %v169, %v213
    %v238 = vadd.f32 %v170, %v213
    %v239 = vadd.f32 %v171, %v213
    %v240 = vadd.f32 %v172, %v213
    %v241 = vadd.f32 %v173, %v213
    %v242 = vadd.f32 %v174, %v213
    %v243 = vadd.f32 %v175, %v213
    %v244 = vadd.f32 %v176, %v213
    %v245 = vadd.f32 %v177, %v213
    %v246 = vadd.f32 %v178, %v213
    %v247 = vadd.f32 %v179, %v213
    %v248 = vadd.f32 %v180, %v213
    %v249 = vadd.f32 %v181, %v213
    %v250 = vadd.f32 %v182, %v213
    %v251 = vadd.f32 %v183, %v213
    %v252 = vadd.f32 %v184, %v213
    %v253 = vadd.f32 %v185, %v213
    %v254 = vadd.f32 %v186, %v213
    %v255 = vadd.f32 %v187, %v213
    %v256 = vadd.f32 %v188, %v213
    %v257 = vadd.f32 %v189, %v213
    %v258 = vadd.f32 %v190, %v213
    %v259 = vadd.f32 %v191, %v213
    %v260 = vadd.f32 %v192, %v213
    %v261 = vadd.f32 %v193, %v213
    %v262 = vadd.f32 %v194, %v213
    %v263 = vadd.f32 %v195, %v213
    %v264 = vadd.f32 %v196, %v213
    %v265 = vadd.f32 %v197, %v213
    %v266 = vadd.f32 %v198, %v213
    %v267 = vadd.f32 %v199, %v213
    %v268 = vadd.f32 %v200, %v213
    %v269 = vadd.f32 %v201, %v213
    %v270 = vadd.f32 %v202, %v213
    %v271 = vadd.f32 %v203, %v213
    %v272 = vadd.f32 %v204, %v213
    %v273 = vadd.f32 %v205, %v213
    %v274 = vadd.f32 %v206, %v213
    %v275 = vadd.f32 %v207, %v213
    %v276 = vadd.f32 %v208, %v213
    %v277 = vadd.f32 %v209, %v213
    %v278 = vadd.f32 %v210, %v213
    %v279 = vmax.f32 %v215, 0.0
    %v280 = vmax.f32 %v216, 0.0
    %v281 = vmax.f32 %v217, 0.0
    %v282 = vmax.f32 %v218, 0.0
    %v283 = vmax.f32 %v219, 0.0
    %v284 = vmax.f32 %v220, 0.0
    %v285 = vmax.f32 %v221, 0.0
    %v286 = vmax.f32 %v222, 0.0
    %v287 = vmax.f32 %v223, 0.0
    %v288 = vmax.f32 %v224, 0.0
    %v289 = vmax.f32 %v225, 0.0
    %v290 = vmax.f32 %v226, 0.0
    %v291 = vmax.f32 %v227, 0.0
    %v292 = vmax.f32 %v228, 0.0
    %v293 = vmax.f32 %v229, 0.0
    %v294 = vmax.f32 %v230, 0.0
    %v295 = vmax.f32 %v231, 0.0
    %v296 = vmax.f32 %v232, 0.0
    %v297 = vmax.f32 %v233, 0.0
    %v298 = vmax.f32 %v234, 0.0
    %v299 = vmax.f32 %v235, 0.0
    %v300 = vmax.f32 %v236, 0.0
    %v301 = vmax.f32 %v237, 0.0
    %v302 = vmax.f32 %v238, 0.0
    %v303 = vmax.f32 %v239, 0.0
    %v304 = vmax.f32 %v240, 0.0
    %v305 = vmax.f32 %v241, 0.0
    %v306 = vmax.f32 %v242, 0.0
    %v307 = vmax.f32 %v243, 0.0
    %v308 = vmax.f32 %v244, 0.0
    %v309 = vmax.f32 %v245, 0.0
    %v310 = vmax.f32 %v246, 0.0
    %v311 = vmax.f32 %v247, 0.0
    %v312 = vmax.f32 %v248, 0.0
    %v313 = vmax.f32 %v249, 0.0
    %v314 = vmax.f32 %v250, 0.0
    %v315 = vmax.f32 %v251, 0.0
    %v316 = vmax.f32 %v252, 0.0
    %v317 = vmax.f32 %v253, 0.0
    %v318 = vmax.f32 %v254, 0.0
    %v319 = vmax.f32 %v255, 0.0
    %v320 = vmax.f32 %v256, 0.0
    %v321 = vmax.f32 %v257, 0.0
    %v322 = vmax.f32 %v258, 0.0
    %v323 = vmax.f32 %v259, 0.0
    %v324 = vmax.f32 %v260, 0.0
    %v325 = vmax.f32 %v261, 0.0
    %v326 = vmax.f32 %v262, 0.0
    %v327 = vmax.f32 %v263, 0.0
    %v328 = vmax.f32 %v264, 0.0
    %v329 = vmax.f32 %v265, 0.0
    %v330 = vmax.f32 %v266, 0.0
    %v331 = vmax.f32 %v267, 0.0
    %v332 = vmax.f32 %v268, 0.0
    %v333 = vmax.f32 %v269, 0.0
    %v334 = vmax.f32 %v270, 0.0
    %v335 = vmax.f32 %v271, 0.0
    %v336 = vmax.f32 %v272, 0.0
    %v337 = vmax.f32 %v273, 0.0
    %v338 = vmax.f32 %v274, 0.0
    %v339 = vmax.f32 %v275, 0.0
    %v340 = vmax.f32 %v276, 0.0
    %v341 = vmax.f32 %v277, 0.0
    %v342 = vmax.f32 %v278, 0.0
    %343 = vst [vmem:[#allocation2] sm:$0xff] %v279
    %344 = vst [vmem:[#allocation2 + $0x8] sm:$0xff] %v280
    %345 = vst [vmem:[#allocation2 + $0x10] sm:$0xff] %v281
    %346 = vst [vmem:[#allocation2 + $0x18] sm:$0xff] %v282
    %347 = vst [vmem:[#allocation2 + $0x20] sm:$0xff] %v283
    %348 = vst [vmem:[#allocation2 + $0x28] sm:$0xff] %v284
    %349 = vst [vmem:[#allocation2 + $0x30] sm:$0xff] %v285
    %350 = vst [vmem:[#allocation2 + $0x38] sm:$0xff] %v286
    %351 = vst [vmem:[#allocation2 + $0x40] sm:$0xff] %v287
    %352 = vst [vmem:[#allocation2 + $0x48] sm:$0xff] %v288
    %353 = vst [vmem:[#allocation2 + $0x50] sm:$0xff] %v289
    %354 = vst [vmem:[#allocation2 + $0x58] sm:$0xff] %v290
    %355 = vst [vmem:[#allocation2 + $0x60] sm:$0xff] %v291
    %356 = vst [vmem:[#allocation2 + $0x68] sm:$0xff] %v292
    %357 = vst [vmem:[#allocation2 + $0x70] sm:$0xff] %v293
    %358 = vst [vmem:[#allocation2 + $0x78] sm:$0xff] %v294
    %359 = vst [vmem:[#allocation2 + $0x80] sm:$0xff] %v295
    %360 = vst [vmem:[#allocation2 + $0x88] sm:$0xff] %v296
    %361 = vst [vmem:[#allocation2 + $0x90] sm:$0xff] %v297
    %362 = vst [vmem:[#allocation2 + $0x98] sm:$0xff] %v298
    %363 = vst [vmem:[#allocation2 + $0xa0] sm:$0xff] %v299
    %364 = vst [vmem:[#allocation2 + $0xa8] sm:$0xff] %v300
    %365 = vst [vmem:[#allocation2 + $0xb0] sm:$0xff] %v301
    %366 = vst [vmem:[#allocation2 + $0xb8] sm:$0xff] %v302
    %367 = vst [vmem:[#allocation2 + $0xc0] sm:$0xff] %v303
    %368 = vst [vmem:[#allocation2 + $0xc8] sm:$0xff] %v304
    %369 = vst [vmem:[#allocation2 + $0xd0] sm:$0xff] %v305
    %370 = vst [vmem:[#allocation2 + $0xd8] sm:$0xff] %v306
    %371 = vst [vmem:[#allocation2 + $0xe0] sm:$0xff] %v307
    %372 = vst [vmem:[#allocation2 + $0xe8] sm:$0xff] %v308
    %373 = vst [vmem:[#allocation2 + $0xf0] sm:$0xff] %v309
    %374 = vst [vmem:[#allocation2 + $0xf8] sm:$0xff] %v310
    %375 = vst [vmem:[#allocation2 + $0x100] sm:$0xff] %v311
    %376 = vst [vmem:[#allocation2 + $0x108] sm:$0xff] %v312
    %377 = vst [vmem:[#allocation2 + $0x110] sm:$0xff] %v313
    %378 = vst [vmem:[#allocation2 + $0x118] sm:$0xff] %v314
    %379 = vst [vmem:[#allocation2 + $0x120] sm:$0xff] %v315
    %380 = vst [vmem:[#allocation2 + $0x128] sm:$0xff] %v316
    %381 = vst [vmem:[#allocation2 + $0x130] sm:$0xff] %v317
    %382 = vst [vmem:[#allocation2 + $0x138] sm:$0xff] %v318
    %383 = vst [vmem:[#allocation2 + $0x140] sm:$0xff] %v319
    %384 = vst [vmem:[#allocation2 + $0x148] sm:$0xff] %v320
    %385 = vst [vmem:[#allocation2 + $0x150] sm:$0xff] %v321
    %386 = vst [vmem:[#allocation2 + $0x158] sm:$0xff] %v322
    %387 = vst [vmem:[#allocation2 + $0x160] sm:$0xff] %v323
    %388 = vst [vmem:[#allocation2 + $0x168] sm:$0xff] %v324
    %389 = vst [vmem:[#allocation2 + $0x170] sm:$0xff] %v325
    %390 = vst [vmem:[#allocation2 + $0x178] sm:$0xff] %v326
    %391 = vst [vmem:[#allocation2 + $0x180] sm:$0xff] %v327
    %392 = vst [vmem:[#allocation2 + $0x188] sm:$0xff] %v328
    %393 = vst [vmem:[#allocation2 + $0x190] sm:$0xff] %v329
    %394 = vst [vmem:[#allocation2 + $0x198] sm:$0xff] %v330
    %395 = vst [vmem:[#allocation2 + $0x1a0] sm:$0xff] %v331
    %396 = vst [vmem:[#allocation2 + $0x1a8] sm:$0xff] %v332
    %397 = vst [vmem:[#allocation2 + $0x1b0] sm:$0xff] %v333
    %398 = vst [vmem:[#allocation2 + $0x1b8] sm:$0xff] %v334
    %399 = vst [vmem:[#allocation2 + $0x1c0] sm:$0xff] %v335
    %400 = vst [vmem:[#allocation2 + $0x1c8] sm:$0xff] %v336
    %401 = vst [vmem:[#allocation2 + $0x1d0] sm:$0xff] %v337
    %402 = vst [vmem:[#allocation2 + $0x1d8] sm:$0xff] %v338
    %403 = vst [vmem:[#allocation2 + $0x1e0] sm:$0xff] %v339
    %404 = vst [vmem:[#allocation2 + $0x1e8] sm:$0xff] %v340
    %405 = vst [vmem:[#allocation2 + $0x1f0] sm:$0xff] %v341
    %406 = vst [vmem:[#allocation2 + $0x1f8] sm:$0xff] %v342
    // Predicated region
    $region14: #{base_conv_forward.3} parent=1 // pred_check
      _
    $region15: #{base_conv_forward.3} parent=1 // pred_check_branch
      %408 = sbr.rel (0) target = $region17
    $region16: #{base_conv_forward.3} parent=1 // pred_region
      %410 = vsyncadd [#allocation3], 0
      %s411 = sshll.u32 [#allocation2], 4
      %s412 = int_to_ptr.vmem [resolvable:$true] %s411
      %s413 = sshll.u32 %s3, 4
      %s414 = int_to_ptr.hbm [resolvable:$true] %s413
      %419 = dma.vmem_to_hbm [thread:$0]  %s412, 8192, %s414, [#allocation3], 128, 128, 8
    $region17: #{base_conv_forward.3} parent=1 // pred_fallthru
      _
    // Predicated region
    $region18: #{base_conv_forward.3} parent=1 // pred_check
      _
    $region19: #{base_conv_forward.3} parent=1 // pred_check_branch
      %421 = sbr.rel (0) target = $region21
    $region20: #{base_conv_forward.3} parent=1 // pred_region
      %423 = dma.done [#allocation3], 8192
    $region21: #{base_conv_forward.3} parent=1 // pred_fallthru
      _
    %424 = vsyncpa [#allocation3], 1

// kernel: base_conv_forward.2
$region0: #{base_conv_forward.2}
  #allocation0 [shape = 'u32[]', space=smem, size = 0x4, offset = 0x4, fixed_abs, tag = 'smem constant byte address 0x4 - core index']
  #allocation1 [shape = 'u32[72,128]{1,0:T(1,128)}', space=vmem, size = 0x9000, scoped, tag = 'internal scratch']
  %s0 = inlined_call_operand.vmem [shape: bf16[512,36], index: 0, kind: input, shape index: {}]
  %s1 = inlined_call_operand.vmem [shape: bf16[36,128], index: 1, kind: input, shape index: {}]
  %s2 = inlined_call_operand.vmem [shape: bf16[512,128], index: 2, kind: output, shape index: {0}]
  %s3 = inlined_call_operand.vmem [shape: f32[1,8,128], index: 3, kind: output, shape index: {1}]
  %4 = xla_tuple %s2, %s3
  %s5 = sld [smem:[#allocation0]]
  $region26: #{base_conv_forward.2} parent=0
    _
  %s7 = ssub.s32 1, %s5
  %s8 = scalar_select 0, %s7, %s5
  // Predicated region
  $region2: #{base_conv_forward.2} parent=0 // pred_check
    _
  $region3: #{base_conv_forward.2} parent=0 // pred_check_branch
    %10 = sbr.rel (0) target = $region5
  $region4: #{base_conv_forward.2} parent=0 // pred_region
    _
  $region5: #{base_conv_forward.2} parent=0 // pred_fallthru
    _
  // Predicated region
  $region6: #{base_conv_forward.2} parent=0 // pred_check
    _
  $region7: #{base_conv_forward.2} parent=0 // pred_check_branch
    %12 = sbr.rel (0) target = $region9
  $region8: #{base_conv_forward.2} parent=0 // pred_region
    _
  $region9: #{base_conv_forward.2} parent=0 // pred_fallthru
    _
  %v14 = vld [vmem:[%s0] sm:$0xf]
  %v15 = vld [vmem:[%s0 + $0x4] sm:$0xf]
  %v16 = vld [vmem:[%s0 + $0x8] sm:$0xf]
  %v17 = vld [vmem:[%s0 + $0xc] sm:$0xf]
  %v18 = vld [vmem:[%s0 + $0x10] sm:$0xf]
  %v19 = vld [vmem:[%s0 + $0x14] sm:$0xf]
  %v20 = vld [vmem:[%s0 + $0x18] sm:$0xf]
  %v21 = vld [vmem:[%s0 + $0x1c] sm:$0xf]
  %v22 = vld [vmem:[%s0 + $0x20] sm:$0xf]
  %v23 = vld [vmem:[%s0 + $0x24] sm:$0xf]
  %v24 = vld [vmem:[%s0 + $0x28] sm:$0xf]
  %v25 = vld [vmem:[%s0 + $0x2c] sm:$0xf]
  %v26 = vld [vmem:[%s0 + $0x30] sm:$0xf]
  %v27 = vld [vmem:[%s0 + $0x34] sm:$0xf]
  %v28 = vld [vmem:[%s0 + $0x38] sm:$0xf]
  %v29 = vld [vmem:[%s0 + $0x3c] sm:$0xf]
  %v30 = vld [vmem:[%s0 + $0x40] sm:$0xf]
  %v31 = vld [vmem:[%s0 + $0x44] sm:$0xf]
  %v32 = vld [vmem:[%s0 + $0x48] sm:$0xf]
  %v33 = vld [vmem:[%s0 + $0x4c] sm:$0xf]
  %v34 = vld [vmem:[%s0 + $0x50] sm:$0xf]
  %v35 = vld [vmem:[%s0 + $0x54] sm:$0xf]
  %v36 = vld [vmem:[%s0 + $0x58] sm:$0xf]
  %v37 = vld [vmem:[%s0 + $0x5c] sm:$0xf]
  %v38 = vld [vmem:[%s0 + $0x60] sm:$0xf]
  %v39 = vld [vmem:[%s0 + $0x64] sm:$0xf]
  %v40 = vld [vmem:[%s0 + $0x68] sm:$0xf]
  %v41 = vld [vmem:[%s0 + $0x6c] sm:$0xf]
  %v42 = vld [vmem:[%s0 + $0x70] sm:$0xf]
  %v43 = vld [vmem:[%s0 + $0x74] sm:$0xf]
  %v44 = vld [vmem:[%s0 + $0x78] sm:$0xf]
  %v45 = vld [vmem:[%s0 + $0x7c] sm:$0xf]
  %v46 = vld [vmem:[%s0 + $0x80] sm:$0xf]
  %v47 = vld [vmem:[%s0 + $0x84] sm:$0xf]
  %v48 = vld [vmem:[%s0 + $0x88] sm:$0xf]
  %v49 = vld [vmem:[%s0 + $0x8c] sm:$0xf]
  %v50 = vld [vmem:[%s0 + $0x90] sm:$0xf]
  %v51 = vld [vmem:[%s0 + $0x94] sm:$0xf]
  %v52 = vld [vmem:[%s0 + $0x98] sm:$0xf]
  %v53 = vld [vmem:[%s0 + $0x9c] sm:$0xf]
  %v54 = vld [vmem:[%s0 + $0xa0] sm:$0xf]
  %v55 = vld [vmem:[%s0 + $0xa4] sm:$0xf]
  %v56 = vld [vmem:[%s0 + $0xa8] sm:$0xf]
  %v57 = vld [vmem:[%s0 + $0xac] sm:$0xf]
  %v58 = vld [vmem:[%s0 + $0xb0] sm:$0xf]
  %v59 = vld [vmem:[%s0 + $0xb4] sm:$0xf]
  %v60 = vld [vmem:[%s0 + $0xb8] sm:$0xf]
  %v61 = vld [vmem:[%s0 + $0xbc] sm:$0xf]
  %v62 = vld [vmem:[%s0 + $0xc0] sm:$0xf]
  %v63 = vld [vmem:[%s0 + $0xc4] sm:$0xf]
  %v64 = vld [vmem:[%s0 + $0xc8] sm:$0xf]
  %v65 = vld [vmem:[%s0 + $0xcc] sm:$0xf]
  %v66 = vld [vmem:[%s0 + $0xd0] sm:$0xf]
  %v67 = vld [vmem:[%s0 + $0xd4] sm:$0xf]
  %v68 = vld [vmem:[%s0 + $0xd8] sm:$0xf]
  %v69 = vld [vmem:[%s0 + $0xdc] sm:$0xf]
  %v70 = vld [vmem:[%s0 + $0xe0] sm:$0xf]
  %v71 = vld [vmem:[%s0 + $0xe4] sm:$0xf]
  %v72 = vld [vmem:[%s0 + $0xe8] sm:$0xf]
  %v73 = vld [vmem:[%s0 + $0xec] sm:$0xf]
  %v74 = vld [vmem:[%s0 + $0xf0] sm:$0xf]
  %v75 = vld [vmem:[%s0 + $0xf4] sm:$0xf]
  %v76 = vld [vmem:[%s0 + $0xf8] sm:$0xf]
  %v77 = vld [vmem:[%s0 + $0xfc] sm:$0xf]
  %v78 = vld [vmem:[%s1] sm:$0xf]
  %v79 = vld [vmem:[%s1 + $0x4] sm:$0xf]
  %v80 = vld [vmem:[%s1 + $0x8] sm:$0xf]
  %v81 = vld [vmem:[%s1 + $0xc] sm:$0xf]
  %v82 = vld [vmem:[%s1 + $0x10] sm:$0x3]
  %v147 = vunpack.c.l.b16 %v14
  %v148 = vunpack.c.l.b16 %v15
  %v149 = vunpack.c.l.b16 %v16
  %v150 = vunpack.c.l.b16 %v17
  %v151 = vunpack.c.l.b16 %v18
  %v152 = vunpack.c.l.b16 %v19
  %v153 = vunpack.c.l.b16 %v20
  %v154 = vunpack.c.l.b16 %v21
  %v155 = vunpack.c.l.b16 %v22
  %v156 = vunpack.c.l.b16 %v23
  %v157 = vunpack.c.l.b16 %v24
  %v158 = vunpack.c.l.b16 %v25
  %v159 = vunpack.c.l.b16 %v26
  %v160 = vunpack.c.l.b16 %v27
  %v161 = vunpack.c.l.b16 %v28
  %v162 = vunpack.c.l.b16 %v29
  %v163 = vunpack.c.l.b16 %v30
  %v164 = vunpack.c.l.b16 %v31
  %v165 = vunpack.c.l.b16 %v32
  %v166 = vunpack.c.l.b16 %v33
  %v167 = vunpack.c.l.b16 %v34
  %v168 = vunpack.c.l.b16 %v35
  %v169 = vunpack.c.l.b16 %v36
  %v170 = vunpack.c.l.b16 %v37
  %v171 = vunpack.c.l.b16 %v38
  %v172 = vunpack.c.l.b16 %v39
  %v173 = vunpack.c.l.b16 %v40
  %v174 = vunpack.c.l.b16 %v41
  %v175 = vunpack.c.l.b16 %v42
  %v176 = vunpack.c.l.b16 %v43
  %v177 = vunpack.c.l.b16 %v44
  %v178 = vunpack.c.l.b16 %v45
  %v179 = vunpack.c.l.b16 %v46
  %v180 = vunpack.c.l.b16 %v47
  %v181 = vunpack.c.l.b16 %v48
  %v182 = vunpack.c.l.b16 %v49
  %v183 = vunpack.c.l.b16 %v50
  %v184 = vunpack.c.l.b16 %v51
  %v185 = vunpack.c.l.b16 %v52
  %v186 = vunpack.c.l.b16 %v53
  %v187 = vunpack.c.l.b16 %v54
  %v188 = vunpack.c.l.b16 %v55
  %v189 = vunpack.c.l.b16 %v56
  %v190 = vunpack.c.l.b16 %v57
  %v191 = vunpack.c.l.b16 %v58
  %v192 = vunpack.c.l.b16 %v59
  %v193 = vunpack.c.l.b16 %v60
  %v194 = vunpack.c.l.b16 %v61
  %v195 = vunpack.c.l.b16 %v62
  %v196 = vunpack.c.l.b16 %v63
  %v197 = vunpack.c.l.b16 %v64
  %v198 = vunpack.c.l.b16 %v65
  %v199 = vunpack.c.l.b16 %v66
  %v200 = vunpack.c.l.b16 %v67
  %v201 = vunpack.c.l.b16 %v68
  %v202 = vunpack.c.l.b16 %v69
  %v203 = vunpack.c.l.b16 %v70
  %v204 = vunpack.c.l.b16 %v71
  %v205 = vunpack.c.l.b16 %v72
  %v206 = vunpack.c.l.b16 %v73
  %v207 = vunpack.c.l.b16 %v74
  %v208 = vunpack.c.l.b16 %v75
  %v209 = vunpack.c.l.b16 %v76
  %v210 = vunpack.c.l.b16 %v77
  %v211 = vpack.c.b16 %v148, %v147
  %v212 = vpack.c.b16 %v150, %v149
  %v213 = vpack.c.b16 %v152, %v151
  %v214 = vpack.c.b16 %v154, %v153
  %v215 = vpack.c.b16 %v156, %v155
  %v216 = vpack.c.b16 %v158, %v157
  %v217 = vpack.c.b16 %v160, %v159
  %v218 = vpack.c.b16 %v162, %v161
  %v219 = vpack.c.b16 %v164, %v163
  %v220 = vpack.c.b16 %v166, %v165
  %v221 = vpack.c.b16 %v168, %v167
  %v222 = vpack.c.b16 %v170, %v169
  %v223 = vpack.c.b16 %v172, %v171
  %v224 = vpack.c.b16 %v174, %v173
  %v225 = vpack.c.b16 %v176, %v175
  %v226 = vpack.c.b16 %v178, %v177
  %v227 = vpack.c.b16 %v180, %v179
  %v228 = vpack.c.b16 %v182, %v181
  %v229 = vpack.c.b16 %v184, %v183
  %v230 = vpack.c.b16 %v186, %v185
  %v231 = vpack.c.b16 %v188, %v187
  %v232 = vpack.c.b16 %v190, %v189
  %v233 = vpack.c.b16 %v192, %v191
  %v234 = vpack.c.b16 %v194, %v193
  %v235 = vpack.c.b16 %v196, %v195
  %v236 = vpack.c.b16 %v198, %v197
  %v237 = vpack.c.b16 %v200, %v199
  %v238 = vpack.c.b16 %v202, %v201
  %v239 = vpack.c.b16 %v204, %v203
  %v240 = vpack.c.b16 %v206, %v205
  %v241 = vpack.c.b16 %v208, %v207
  %v242 = vpack.c.b16 %v210, %v209
  %v248 = vunpack.c.l.b16 %v78
  %v249 = vunpack.c.l.b16 %v79
  %v250 = vunpack.c.l.b16 %v80
  %v251 = vunpack.c.l.b16 %v81
  %v252 = vunpack.c.l.b16 %v82
  %v253 = vpack.c.b16 %v249, %v248
  %v254 = vpack.c.b16 %v251, %v250
  %v255 = vpack.c.b16 %v252, %v252
  %vm258 = vcmask 293888
  %v260 = vsel %vm258, %v211, 0
  %v263 = vsel %vm258, %v212, 0
  %v266 = vsel %vm258, %v213, 0
  %v269 = vsel %vm258, %v214, 0
  %v272 = vsel %vm258, %v215, 0
  %v275 = vsel %vm258, %v216, 0
  %v278 = vsel %vm258, %v217, 0
  %v281 = vsel %vm258, %v218, 0
  %v284 = vsel %vm258, %v219, 0
  %v287 = vsel %vm258, %v220, 0
  %v290 = vsel %vm258, %v221, 0
  %v293 = vsel %vm258, %v222, 0
  %v296 = vsel %vm258, %v223, 0
  %v299 = vsel %vm258, %v224, 0
  %v302 = vsel %vm258, %v225, 0
  %v305 = vsel %vm258, %v226, 0
  %v308 = vsel %vm258, %v227, 0
  %v311 = vsel %vm258, %v228, 0
  %v314 = vsel %vm258, %v229, 0
  %v317 = vsel %vm258, %v230, 0
  %v320 = vsel %vm258, %v231, 0
  %v323 = vsel %vm258, %v232, 0
  %v326 = vsel %vm258, %v233, 0
  %v329 = vsel %vm258, %v234, 0
  %v332 = vsel %vm258, %v235, 0
  %v335 = vsel %vm258, %v236, 0
  %v338 = vsel %vm258, %v237, 0
  %v341 = vsel %vm258, %v238, 0
  %v344 = vsel %vm258, %v239, 0
  %v347 = vsel %vm258, %v240, 0
  %v350 = vsel %vm258, %v241, 0
  %v353 = vsel %vm258, %v242, 0
  %vm355 = vcmask 1041408
  %v357 = vsel %vm355, %v255, 0
  %359 = vmatpush.bf16.msra.mxu0 0
  %360 = vmatpush.bf16.msra.mxu0 0
  %361 = vmatpush.bf16.msra.mxu0 0
  %362 = vmatpush.bf16.msra.mxu0 0
  %363 = vmatpush.bf16.msra.mxu0 0
  %364 = vmatpush.bf16.msra.mxu0 %v357
  %365 = vmatpush.bf16.msra.mxu0 %v254
  %366 = vmatpush.bf16.msra.mxu0 %v253
  %367 = vmatmul.bf16.gmra.mxu0 %v260
  %v368 = vpop.f32.mrf.mxu0
  %v369 = vadd.f32 0.0, %v368
  %v370 = vpop.f32.mrf.mxu0
  %v371 = vadd.f32 0.0, %v370
  %372 = vmatmul.bf16.gmra.mxu0 %v263
  %v373 = vpop.f32.mrf.mxu0
  %v374 = vadd.f32 0.0, %v373
  %v375 = vpop.f32.mrf.mxu0
  %v376 = vadd.f32 0.0, %v375
  %377 = vmatmul.bf16.gmra.mxu0 %v266
  %v378 = vpop.f32.mrf.mxu0
  %v379 = vadd.f32 0.0, %v378
  %v380 = vpop.f32.mrf.mxu0
  %v381 = vadd.f32 0.0, %v380
  %382 = vmatmul.bf16.gmra.mxu0 %v269
  %v383 = vpop.f32.mrf.mxu0
  %v384 = vadd.f32 0.0, %v383
  %v385 = vpop.f32.mrf.mxu0
  %v386 = vadd.f32 0.0, %v385
  %387 = vmatmul.bf16.gmra.mxu0 %v272
  %v388 = vpop.f32.mrf.mxu0
  %v389 = vadd.f32 0.0, %v388
  %v390 = vpop.f32.mrf.mxu0
  %v391 = vadd.f32 0.0, %v390
  %392 = vmatmul.bf16.gmra.mxu0 %v275
  %v393 = vpop.f32.mrf.mxu0
  %v394 = vadd.f32 0.0, %v393
  %v395 = vpop.f32.mrf.mxu0
  %v396 = vadd.f32 0.0, %v395
  %397 = vmatmul.bf16.gmra.mxu0 %v278
  %v398 = vpop.f32.mrf.mxu0
  %v399 = vadd.f32 0.0, %v398
  %v400 = vpop.f32.mrf.mxu0
  %v401 = vadd.f32 0.0, %v400
  %402 = vmatmul.bf16.gmra.mxu0 %v281
  %v403 = vpop.f32.mrf.mxu0
  %v404 = vadd.f32 0.0, %v403
  %v405 = vpop.f32.mrf.mxu0
  %v406 = vadd.f32 0.0, %v405
  %407 = vmatmul.bf16.gmra.mxu0 %v284
  %v408 = vpop.f32.mrf.mxu0
  %v409 = vadd.f32 0.0, %v408
  %v410 = vpop.f32.mrf.mxu0
  %v411 = vadd.f32 0.0, %v410
  %412 = vmatmul.bf16.gmra.mxu0 %v287
  %v413 = vpop.f32.mrf.mxu0
  %v414 = vadd.f32 0.0, %v413
  %v415 = vpop.f32.mrf.mxu0
  %v416 = vadd.f32 0.0, %v415
  %417 = vmatmul.bf16.gmra.mxu0 %v290
  %v418 = vpop.f32.mrf.mxu0
  %v419 = vadd.f32 0.0, %v418
  %v420 = vpop.f32.mrf.mxu0
  %v421 = vadd.f32 0.0, %v420
  %422 = vmatmul.bf16.gmra.mxu0 %v293
  %v423 = vpop.f32.mrf.mxu0
  %v424 = vadd.f32 0.0, %v423
  %v425 = vpop.f32.mrf.mxu0
  %v426 = vadd.f32 0.0, %v425
  %427 = vmatmul.bf16.gmra.mxu0 %v296
  %v428 = vpop.f32.mrf.mxu0
  %v429 = vadd.f32 0.0, %v428
  %v430 = vpop.f32.mrf.mxu0
  %v431 = vadd.f32 0.0, %v430
  %432 = vmatmul.bf16.gmra.mxu0 %v299
  %v433 = vpop.f32.mrf.mxu0
  %v434 = vadd.f32 0.0, %v433
  %v435 = vpop.f32.mrf.mxu0
  %v436 = vadd.f32 0.0, %v435
  %437 = vmatmul.bf16.gmra.mxu0 %v302
  %v438 = vpop.f32.mrf.mxu0
  %v439 = vadd.f32 0.0, %v438
  %v440 = vpop.f32.mrf.mxu0
  %v441 = vadd.f32 0.0, %v440
  %442 = vmatmul.bf16.gmra.mxu0 %v305
  %v443 = vpop.f32.mrf.mxu0
  %v444 = vadd.f32 0.0, %v443
  %v445 = vpop.f32.mrf.mxu0
  %v446 = vadd.f32 0.0, %v445
  %447 = vmatmul.bf16.gmra.mxu0 %v308
  %v448 = vpop.f32.mrf.mxu0
  %v449 = vadd.f32 0.0, %v448
  %v450 = vpop.f32.mrf.mxu0
  %v451 = vadd.f32 0.0, %v450
  %452 = vmatmul.bf16.gmra.mxu0 %v311
  %v453 = vpop.f32.mrf.mxu0
  %v454 = vadd.f32 0.0, %v453
  %v455 = vpop.f32.mrf.mxu0
  %v456 = vadd.f32 0.0, %v455
  %457 = vmatmul.bf16.gmra.mxu0 %v314
  %v458 = vpop.f32.mrf.mxu0
  %v459 = vadd.f32 0.0, %v458
  %v460 = vpop.f32.mrf.mxu0
  %v461 = vadd.f32 0.0, %v460
  %462 = vmatmul.bf16.gmra.mxu0 %v317
  %v463 = vpop.f32.mrf.mxu0
  %v464 = vadd.f32 0.0, %v463
  %v465 = vpop.f32.mrf.mxu0
  %v466 = vadd.f32 0.0, %v465
  %467 = vmatmul.bf16.gmra.mxu0 %v320
  %v468 = vpop.f32.mrf.mxu0
  %v469 = vadd.f32 0.0, %v468
  %v470 = vpop.f32.mrf.mxu0
  %v471 = vadd.f32 0.0, %v470
  %472 = vmatmul.bf16.gmra.mxu0 %v323
  %v473 = vpop.f32.mrf.mxu0
  %v474 = vadd.f32 0.0, %v473
  %v475 = vpop.f32.mrf.mxu0
  %v476 = vadd.f32 0.0, %v475
  %477 = vmatmul.bf16.gmra.mxu0 %v326
  %v478 = vpop.f32.mrf.mxu0
  %v479 = vadd.f32 0.0, %v478
  %v480 = vpop.f32.mrf.mxu0
  %v481 = vadd.f32 0.0, %v480
  %482 = vmatmul.bf16.gmra.mxu0 %v329
  %v483 = vpop.f32.mrf.mxu0
  %v484 = vadd.f32 0.0, %v483
  %v485 = vpop.f32.mrf.mxu0
  %v486 = vadd.f32 0.0, %v485
  %487 = vmatmul.bf16.gmra.mxu0 %v332
  %v488 = vpop.f32.mrf.mxu0
  %v489 = vadd.f32 0.0, %v488
  %v490 = vpop.f32.mrf.mxu0
  %v491 = vadd.f32 0.0, %v490
  %492 = vmatmul.bf16.gmra.mxu0 %v335
  %v493 = vpop.f32.mrf.mxu0
  %v494 = vadd.f32 0.0, %v493
  %v495 = vpop.f32.mrf.mxu0
  %v496 = vadd.f32 0.0, %v495
  %497 = vmatmul.bf16.gmra.mxu0 %v338
  %v498 = vpop.f32.mrf.mxu0
  %v499 = vadd.f32 0.0, %v498
  %v500 = vpop.f32.mrf.mxu0
  %v501 = vadd.f32 0.0, %v500
  %502 = vmatmul.bf16.gmra.mxu0 %v341
  %v503 = vpop.f32.mrf.mxu0
  %v504 = vadd.f32 0.0, %v503
  %v505 = vpop.f32.mrf.mxu0
  %v506 = vadd.f32 0.0, %v505
  %507 = vmatmul.bf16.gmra.mxu0 %v344
  %v508 = vpop.f32.mrf.mxu0
  %v509 = vadd.f32 0.0, %v508
  %v510 = vpop.f32.mrf.mxu0
  %v511 = vadd.f32 0.0, %v510
  %512 = vmatmul.bf16.gmra.mxu0 %v347
  %v513 = vpop.f32.mrf.mxu0
  %v514 = vadd.f32 0.0, %v513
  %v515 = vpop.f32.mrf.mxu0
  %v516 = vadd.f32 0.0, %v515
  %517 = vmatmul.bf16.gmra.mxu0 %v350
  %v518 = vpop.f32.mrf.mxu0
  %v519 = vadd.f32 0.0, %v518
  %v520 = vpop.f32.mrf.mxu0
  %v521 = vadd.f32 0.0, %v520
  %522 = vmatmul.bf16.gmra.mxu0 %v353
  %v523 = vpop.f32.mrf.mxu0
  %v524 = vadd.f32 0.0, %v523
  %v525 = vpop.f32.mrf.mxu0
  %v526 = vadd.f32 0.0, %v525
  %527 = vdwg.mxu0
  %v528 = vpack.c.bf16 %v369, %v369
  %v529 = vpack.c.bf16 %v371, %v371
  %v530 = vpack.c.bf16 %v374, %v374
  %v531 = vpack.c.bf16 %v376, %v376
  %v532 = vpack.c.bf16 %v379, %v379
  %v533 = vpack.c.bf16 %v381, %v381
  %v534 = vpack.c.bf16 %v384, %v384
  %v535 = vpack.c.bf16 %v386, %v386
  %v536 = vpack.c.bf16 %v389, %v389
  %v537 = vpack.c.bf16 %v391, %v391
  %v538 = vpack.c.bf16 %v394, %v394
  %v539 = vpack.c.bf16 %v396, %v396
  %v540 = vpack.c.bf16 %v399, %v399
  %v541 = vpack.c.bf16 %v401, %v401
  %v542 = vpack.c.bf16 %v404, %v404
  %v543 = vpack.c.bf16 %v406, %v406
  %v544 = vpack.c.bf16 %v409, %v409
  %v545 = vpack.c.bf16 %v411, %v411
  %v546 = vpack.c.bf16 %v414, %v414
  %v547 = vpack.c.bf16 %v416, %v416
  %v548 = vpack.c.bf16 %v419, %v419
  %v549 = vpack.c.bf16 %v421, %v421
  %v550 = vpack.c.bf16 %v424, %v424
  %v551 = vpack.c.bf16 %v426, %v426
  %v552 = vpack.c.bf16 %v429, %v429
  %v553 = vpack.c.bf16 %v431, %v431
  %v554 = vpack.c.bf16 %v434, %v434
  %v555 = vpack.c.bf16 %v436, %v436
  %v556 = vpack.c.bf16 %v439, %v439
  %v557 = vpack.c.bf16 %v441, %v441
  %v558 = vpack.c.bf16 %v444, %v444
  %v559 = vpack.c.bf16 %v446, %v446
  %v560 = vpack.c.bf16 %v449, %v449
  %v561 = vpack.c.bf16 %v451, %v451
  %v562 = vpack.c.bf16 %v454, %v454
  %v563 = vpack.c.bf16 %v456, %v456
  %v564 = vpack.c.bf16 %v459, %v459
  %v565 = vpack.c.bf16 %v461, %v461
  %v566 = vpack.c.bf16 %v464, %v464
  %v567 = vpack.c.bf16 %v466, %v466
  %v568 = vpack.c.bf16 %v469, %v469
  %v569 = vpack.c.bf16 %v471, %v471
  %v570 = vpack.c.bf16 %v474, %v474
  %v571 = vpack.c.bf16 %v476, %v476
  %v572 = vpack.c.bf16 %v479, %v479
  %v573 = vpack.c.bf16 %v481, %v481
  %v574 = vpack.c.bf16 %v484, %v484
  %v575 = vpack.c.bf16 %v486, %v486
  %v576 = vpack.c.bf16 %v489, %v489
  %v577 = vpack.c.bf16 %v491, %v491
  %v578 = vpack.c.bf16 %v494, %v494
  %v579 = vpack.c.bf16 %v496, %v496
  %v580 = vpack.c.bf16 %v499, %v499
  %v581 = vpack.c.bf16 %v501, %v501
  %v582 = vpack.c.bf16 %v504, %v504
  %v583 = vpack.c.bf16 %v506, %v506
  %v584 = vpack.c.bf16 %v509, %v509
  %v585 = vpack.c.bf16 %v511, %v511
  %v586 = vpack.c.bf16 %v514, %v514
  %v587 = vpack.c.bf16 %v516, %v516
  %v588 = vpack.c.bf16 %v519, %v519
  %v589 = vpack.c.bf16 %v521, %v521
  %v590 = vpack.c.bf16 %v524, %v524
  %v591 = vpack.c.bf16 %v526, %v526
  %592 = vst [vmem:[%s2] sm:$0xf] %v528
  %593 = vst [vmem:[%s2 + $0x4] sm:$0xf] %v529
  %594 = vst [vmem:[%s2 + $0x8] sm:$0xf] %v530
  %595 = vst [vmem:[%s2 + $0xc] sm:$0xf] %v531
  %596 = vst [vmem:[%s2 + $0x10] sm:$0xf] %v532
  %597 = vst [vmem:[%s2 + $0x14] sm:$0xf] %v533
  %598 = vst [vmem:[%s2 + $0x18] sm:$0xf] %v534
  %599 = vst [vmem:[%s2 + $0x1c] sm:$0xf] %v535
  %600 = vst [vmem:[%s2 + $0x20] sm:$0xf] %v536
  %601 = vst [vmem:[%s2 + $0x24] sm:$0xf] %v537
  %602 = vst [vmem:[%s2 + $0x28] sm:$0xf] %v538
  %603 = vst [vmem:[%s2 + $0x2c] sm:$0xf] %v539
  %604 = vst [vmem:[%s2 + $0x30] sm:$0xf] %v540
  %605 = vst [vmem:[%s2 + $0x34] sm:$0xf] %v541
  %606 = vst [vmem:[%s2 + $0x38] sm:$0xf] %v542
  %607 = vst [vmem:[%s2 + $0x3c] sm:$0xf] %v543
  %608 = vst [vmem:[%s2 + $0x40] sm:$0xf] %v544
  %609 = vst [vmem:[%s2 + $0x44] sm:$0xf] %v545
  %610 = vst [vmem:[%s2 + $0x48] sm:$0xf] %v546
  %611 = vst [vmem:[%s2 + $0x4c] sm:$0xf] %v547
  %612 = vst [vmem:[%s2 + $0x50] sm:$0xf] %v548
  %613 = vst [vmem:[%s2 + $0x54] sm:$0xf] %v549
  %614 = vst [vmem:[%s2 + $0x58] sm:$0xf] %v550
  %615 = vst [vmem:[%s2 + $0x5c] sm:$0xf] %v551
  %616 = vst [vmem:[%s2 + $0x60] sm:$0xf] %v552
  %617 = vst [vmem:[%s2 + $0x64] sm:$0xf] %v553
  %618 = vst [vmem:[%s2 + $0x68] sm:$0xf] %v554
  %619 = vst [vmem:[%s2 + $0x6c] sm:$0xf] %v555
  %620 = vst [vmem:[%s2 + $0x70] sm:$0xf] %v556
  %621 = vst [vmem:[%s2 + $0x74] sm:$0xf] %v557
  %622 = vst [vmem:[%s2 + $0x78] sm:$0xf] %v558
  %623 = vst [vmem:[%s2 + $0x7c] sm:$0xf] %v559
  %624 = vst [vmem:[%s2 + $0x80] sm:$0xf] %v560
  %625 = vst [vmem:[%s2 + $0x84] sm:$0xf] %v561
  %626 = vst [vmem:[%s2 + $0x88] sm:$0xf] %v562
  %627 = vst [vmem:[%s2 + $0x8c] sm:$0xf] %v563
  %628 = vst [vmem:[%s2 + $0x90] sm:$0xf] %v564
  %629 = vst [vmem:[%s2 + $0x94] sm:$0xf] %v565
  %630 = vst [vmem:[%s2 + $0x98] sm:$0xf] %v566
  %631 = vst [vmem:[%s2 + $0x9c] sm:$0xf] %v567
  %632 = vst [vmem:[%s2 + $0xa0] sm:$0xf] %v568
  %633 = vst [vmem:[%s2 + $0xa4] sm:$0xf] %v569
  %634 = vst [vmem:[%s2 + $0xa8] sm:$0xf] %v570
  %635 = vst [vmem:[%s2 + $0xac] sm:$0xf] %v571
  %636 = vst [vmem:[%s2 + $0xb0] sm:$0xf] %v572
  %637 = vst [vmem:[%s2 + $0xb4] sm:$0xf] %v573
  %638 = vst [vmem:[%s2 + $0xb8] sm:$0xf] %v574
  %639 = vst [vmem:[%s2 + $0xbc] sm:$0xf] %v575
  %640 = vst [vmem:[%s2 + $0xc0] sm:$0xf] %v576
  %641 = vst [vmem:[%s2 + $0xc4] sm:$0xf] %v577
  %642 = vst [vmem:[%s2 + $0xc8] sm:$0xf] %v578
  %643 = vst [vmem:[%s2 + $0xcc] sm:$0xf] %v579
  %644 = vst [vmem:[%s2 + $0xd0] sm:$0xf] %v580
  %645 = vst [vmem:[%s2 + $0xd4] sm:$0xf] %v581
  %646 = vst [vmem:[%s2 + $0xd8] sm:$0xf] %v582
  %647 = vst [vmem:[%s2 + $0xdc] sm:$0xf] %v583
  %648 = vst [vmem:[%s2 + $0xe0] sm:$0xf] %v584
  %649 = vst [vmem:[%s2 + $0xe4] sm:$0xf] %v585
  %650 = vst [vmem:[%s2 + $0xe8] sm:$0xf] %v586
  %651 = vst [vmem:[%s2 + $0xec] sm:$0xf] %v587
  %652 = vst [vmem:[%s2 + $0xf0] sm:$0xf] %v588
  %653 = vst [vmem:[%s2 + $0xf4] sm:$0xf] %v589
  %654 = vst [vmem:[%s2 + $0xf8] sm:$0xf] %v590
  %655 = vst [vmem:[%s2 + $0xfc] sm:$0xf] %v591
  %v656 = vunpack.c.l.bf16 %v528
  %v657 = vunpack.c.l.bf16 %v529
  %v658 = vunpack.c.l.bf16 %v530
  %v659 = vunpack.c.l.bf16 %v531
  %v660 = vunpack.c.l.bf16 %v532
  %v661 = vunpack.c.l.bf16 %v533
  %v662 = vunpack.c.l.bf16 %v534
  %v663 = vunpack.c.l.bf16 %v535
  %v664 = vunpack.c.l.bf16 %v536
  %v665 = vunpack.c.l.bf16 %v537
  %v666 = vunpack.c.l.bf16 %v538
  %v667 = vunpack.c.l.bf16 %v539
  %v668 = vunpack.c.l.bf16 %v540
  %v669 = vunpack.c.l.bf16 %v541
  %v670 = vunpack.c.l.bf16 %v542
  %v671 = vunpack.c.l.bf16 %v543
  %v672 = vunpack.c.l.bf16 %v544
  %v673 = vunpack.c.l.bf16 %v545
  %v674 = vunpack.c.l.bf16 %v546
  %v675 = vunpack.c.l.bf16 %v547
  %v676 = vunpack.c.l.bf16 %v548
  %v677 = vunpack.c.l.bf16 %v549
  %v678 = vunpack.c.l.bf16 %v550
  %v679 = vunpack.c.l.bf16 %v551
  %v680 = vunpack.c.l.bf16 %v552
  %v681 = vunpack.c.l.bf16 %v553
  %v682 = vunpack.c.l.bf16 %v554
  %v683 = vunpack.c.l.bf16 %v555
  %v684 = vunpack.c.l.bf16 %v556
  %v685 = vunpack.c.l.bf16 %v557
  %v686 = vunpack.c.l.bf16 %v558
  %v687 = vunpack.c.l.bf16 %v559
  %v688 = vunpack.c.l.bf16 %v560
  %v689 = vunpack.c.l.bf16 %v561
  %v690 = vunpack.c.l.bf16 %v562
  %v691 = vunpack.c.l.bf16 %v563
  %v692 = vunpack.c.l.bf16 %v564
  %v693 = vunpack.c.l.bf16 %v565
  %v694 = vunpack.c.l.bf16 %v566
  %v695 = vunpack.c.l.bf16 %v567
  %v696 = vunpack.c.l.bf16 %v568
  %v697 = vunpack.c.l.bf16 %v569
  %v698 = vunpack.c.l.bf16 %v570
  %v699 = vunpack.c.l.bf16 %v571
  %v700 = vunpack.c.l.bf16 %v572
  %v701 = vunpack.c.l.bf16 %v573
  %v702 = vunpack.c.l.bf16 %v574
  %v703 = vunpack.c.l.bf16 %v575
  %v704 = vunpack.c.l.bf16 %v576
  %v705 = vunpack.c.l.bf16 %v577
  %v706 = vunpack.c.l.bf16 %v578
  %v707 = vunpack.c.l.bf16 %v579
  %v708 = vunpack.c.l.bf16 %v580
  %v709 = vunpack.c.l.bf16 %v581
  %v710 = vunpack.c.l.bf16 %v582
  %v711 = vunpack.c.l.bf16 %v583
  %v712 = vunpack.c.l.bf16 %v584
  %v713 = vunpack.c.l.bf16 %v585
  %v714 = vunpack.c.l.bf16 %v586
  %v715 = vunpack.c.l.bf16 %v587
  %v716 = vunpack.c.l.bf16 %v588
  %v717 = vunpack.c.l.bf16 %v589
  %v718 = vunpack.c.l.bf16 %v590
  %v719 = vunpack.c.l.bf16 %v591
  %v720 = vadd.f32 %v656, %v657
  %v721 = vadd.f32 %v720, %v658
  %v722 = vadd.f32 %v721, %v659
  %v723 = vadd.f32 %v722, %v660
  %v724 = vadd.f32 %v723, %v661
  %v725 = vadd.f32 %v724, %v662
  %v726 = vadd.f32 %v725, %v663
  %v727 = vadd.f32 %v726, %v664
  %v728 = vadd.f32 %v727, %v665
  %v729 = vadd.f32 %v728, %v666
  %v730 = vadd.f32 %v729, %v667
  %v731 = vadd.f32 %v730, %v668
  %v732 = vadd.f32 %v731, %v669
  %v733 = vadd.f32 %v732, %v670
  %v734 = vadd.f32 %v733, %v671
  %v735 = vadd.f32 %v734, %v672
  %v736 = vadd.f32 %v735, %v673
  %v737 = vadd.f32 %v736, %v674
  %v738 = vadd.f32 %v737, %v675
  %v739 = vadd.f32 %v738, %v676
  %v740 = vadd.f32 %v739, %v677
  %v741 = vadd.f32 %v740, %v678
  %v742 = vadd.f32 %v741, %v679
  %v743 = vadd.f32 %v742, %v680
  %v744 = vadd.f32 %v743, %v681
  %v745 = vadd.f32 %v744, %v682
  %v746 = vadd.f32 %v745, %v683
  %v747 = vadd.f32 %v746, %v684
  %v748 = vadd.f32 %v747, %v685
  %v749 = vadd.f32 %v748, %v686
  %v750 = vadd.f32 %v749, %v687
  %v751 = vadd.f32 %v750, %v688
  %v752 = vadd.f32 %v751, %v689
  %v753 = vadd.f32 %v752, %v690
  %v754 = vadd.f32 %v753, %v691
  %v755 = vadd.f32 %v754, %v692
  %v756 = vadd.f32 %v755, %v693
  %v757 = vadd.f32 %v756, %v694
  %v758 = vadd.f32 %v757, %v695
  %v759 = vadd.f32 %v758, %v696
  %v760 = vadd.f32 %v759, %v697
  %v761 = vadd.f32 %v760, %v698
  %v762 = vadd.f32 %v761, %v699
  %v763 = vadd.f32 %v762, %v700
  %v764 = vadd.f32 %v763, %v701
  %v765 = vadd.f32 %v764, %v702
  %v766 = vadd.f32 %v765, %v703
  %v767 = vadd.f32 %v766, %v704
  %v768 = vadd.f32 %v767, %v705
  %v769 = vadd.f32 %v768, %v706
  %v770 = vadd.f32 %v769, %v707
  %v771 = vadd.f32 %v770, %v708
  %v772 = vadd.f32 %v771, %v709
  %v773 = vadd.f32 %v772, %v710
  %v774 = vadd.f32 %v773, %v711
  %v775 = vadd.f32 %v774, %v712
  %v776 = vadd.f32 %v775, %v713
  %v777 = vadd.f32 %v776, %v714
  %v778 = vadd.f32 %v777, %v715
  %v779 = vadd.f32 %v778, %v716
  %v780 = vadd.f32 %v779, %v717
  %v781 = vadd.f32 %v780, %v718
  %v782 = vadd.f32 %v781, %v719
  %v783 = vrot.slane %v782, 4
  %v784 = vadd.f32 %v782, %v783
  %v785 = vrot.slane %v784, 2
  %v786 = vadd.f32 %v784, %v785
  %v787 = vrot.slane %v786, 1
  %v788 = vadd.f32 %v786, %v787
  %v789 = vmul.f32 %v656, %v656
  %v790 = vmul.f32 %v657, %v657
  %v791 = vmul.f32 %v658, %v658
  %v792 = vmul.f32 %v659, %v659
  %v793 = vmul.f32 %v660, %v660
  %v794 = vmul.f32 %v661, %v661
  %v795 = vmul.f32 %v662, %v662
  %v796 = vmul.f32 %v663, %v663
  %v797 = vmul.f32 %v664, %v664
  %v798 = vmul.f32 %v665, %v665
  %v799 = vmul.f32 %v666, %v666
  %v800 = vmul.f32 %v667, %v667
  %v801 = vmul.f32 %v668, %v668
  %v802 = vmul.f32 %v669, %v669
  %v803 = vmul.f32 %v670, %v670
  %v804 = vmul.f32 %v671, %v671
  %v805 = vmul.f32 %v672, %v672
  %v806 = vmul.f32 %v673, %v673
  %v807 = vmul.f32 %v674, %v674
  %v808 = vmul.f32 %v675, %v675
  %v809 = vmul.f32 %v676, %v676
  %v810 = vmul.f32 %v677, %v677
  %v811 = vmul.f32 %v678, %v678
  %v812 = vmul.f32 %v679, %v679
  %v813 = vmul.f32 %v680, %v680
  %v814 = vmul.f32 %v681, %v681
  %v815 = vmul.f32 %v682, %v682
  %v816 = vmul.f32 %v683, %v683
  %v817 = vmul.f32 %v684, %v684
  %v818 = vmul.f32 %v685, %v685
  %v819 = vmul.f32 %v686, %v686
  %v820 = vmul.f32 %v687, %v687
  %v821 = vmul.f32 %v688, %v688
  %v822 = vmul.f32 %v689, %v689
  %v823 = vmul.f32 %v690, %v690
  %v824 = vmul.f32 %v691, %v691
  %v825 = vmul.f32 %v692, %v692
  %v826 = vmul.f32 %v693, %v693
  %v827 = vmul.f32 %v694, %v694
  %v828 = vmul.f32 %v695, %v695
  %v829 = vmul.f32 %v696, %v696
  %v830 = vmul.f32 %v697, %v697
  %v831 = vmul.f32 %v698, %v698
  %v832 = vmul.f32 %v699, %v699
  %v833 = vmul.f32 %v700, %v700
  %v834 = vmul.f32 %v701, %v701
  %v835 = vmul.f32 %v702, %v702
  %v836 = vmul.f32 %v703, %v703
  %v837 = vmul.f32 %v704, %v704
  %v838 = vmul.f32 %v705, %v705
  %v839 = vmul.f32 %v706, %v706
  %v840 = vmul.f32 %v707, %v707
  %v841 = vmul.f32 %v708, %v708
  %v842 = vmul.f32 %v709, %v709
  %v843 = vmul.f32 %v710, %v710
  %v844 = vmul.f32 %v711, %v711
  %v845 = vmul.f32 %v712, %v712
  %v846 = vmul.f32 %v713, %v713
  %v847 = vmul.f32 %v714, %v714
  %v848 = vmul.f32 %v715, %v715
  %v849 = vmul.f32 %v716, %v716
  %v850 = vmul.f32 %v717, %v717
  %v851 = vmul.f32 %v718, %v718
  %v852 = vmul.f32 %v719, %v719
  %v853 = vadd.f32 %v789, %v790
  %v854 = vadd.f32 %v853, %v791
  %v855 = vadd.f32 %v854, %v792
  %v856 = vadd.f32 %v855, %v793
  %v857 = vadd.f32 %v856, %v794
  %v858 = vadd.f32 %v857, %v795
  %v859 = vadd.f32 %v858, %v796
  %v860 = vadd.f32 %v859, %v797
  %v861 = vadd.f32 %v860, %v798
  %v862 = vadd.f32 %v861, %v799
  %v863 = vadd.f32 %v862, %v800
  %v864 = vadd.f32 %v863, %v801
  %v865 = vadd.f32 %v864, %v802
  %v866 = vadd.f32 %v865, %v803
  %v867 = vadd.f32 %v866, %v804
  %v868 = vadd.f32 %v867, %v805
  %v869 = vadd.f32 %v868, %v806
  %v870 = vadd.f32 %v869, %v807
  %v871 = vadd.f32 %v870, %v808
  %v872 = vadd.f32 %v871, %v809
  %v873 = vadd.f32 %v872, %v810
  %v874 = vadd.f32 %v873, %v811
  %v875 = vadd.f32 %v874, %v812
  %v876 = vadd.f32 %v875, %v813
  %v877 = vadd.f32 %v876, %v814
  %v878 = vadd.f32 %v877, %v815
  %v879 = vadd.f32 %v878, %v816
  %v880 = vadd.f32 %v879, %v817
  %v881 = vadd.f32 %v880, %v818
  %v882 = vadd.f32 %v881, %v819
  %v883 = vadd.f32 %v882, %v820
  %v884 = vadd.f32 %v883, %v821
  %v885 = vadd.f32 %v884, %v822
  %v886 = vadd.f32 %v885, %v823
  %v887 = vadd.f32 %v886, %v824
  %v888 = vadd.f32 %v887, %v825
  %v889 = vadd.f32 %v888, %v826
  %v890 = vadd.f32 %v889, %v827
  %v891 = vadd.f32 %v890, %v828
  %v892 = vadd.f32 %v891, %v829
  %v893 = vadd.f32 %v892, %v830
  %v894 = vadd.f32 %v893, %v831
  %v895 = vadd.f32 %v894, %v832
  %v896 = vadd.f32 %v895, %v833
  %v897 = vadd.f32 %v896, %v834
  %v898 = vadd.f32 %v897, %v835
  %v899 = vadd.f32 %v898, %v836
  %v900 = vadd.f32 %v899, %v837
  %v901 = vadd.f32 %v900, %v838
  %v902 = vadd.f32 %v901, %v839
  %v903 = vadd.f32 %v902, %v840
  %v904 = vadd.f32 %v903, %v841
  %v905 = vadd.f32 %v904, %v842
  %v906 = vadd.f32 %v905, %v843
  %v907 = vadd.f32 %v906, %v844
  %v908 = vadd.f32 %v907, %v845
  %v909 = vadd.f32 %v908, %v846
  %v910 = vadd.f32 %v909, %v847
  %v911 = vadd.f32 %v910, %v848
  %v912 = vadd.f32 %v911, %v849
  %v913 = vadd.f32 %v912, %v850
  %v914 = vadd.f32 %v913, %v851
  %v915 = vadd.f32 %v914, %v852
  %v916 = vrot.slane %v915, 4
  %v917 = vadd.f32 %v915, %v916
  %v918 = vrot.slane %v917, 2
  %v919 = vadd.f32 %v917, %v918
  %v920 = vrot.slane %v919, 1
  %v921 = vadd.f32 %v919, %v920
  %v922 = vlaneseq
  %v923 = vshrl.u32 %v922, 7
  %vm924 = vcmp.eq.s32.totalorder %v923, 0
  %vm925 = vcmp.eq.s32.totalorder %v923, 1
  %v926 = vsel %vm925, %v921, 0.0
  %v927 = vsel %vm924, %v788, %v926
  %928 = vst [vmem:[%s3] sm:$0xff] %v927
  // Predicated region
  $region10: #{base_conv_forward.2} parent=0 // pred_check
    _
  $region11: #{base_conv_forward.2} parent=0 // pred_check_branch
    %930 = sbr.rel (0) target = $region13
  $region12: #{base_conv_forward.2} parent=0 // pred_region
    _
  $region13: #{base_conv_forward.2} parent=0 // pred_fallthru
    _
  // Predicated region
  $region14: #{base_conv_forward.2} parent=0 // pred_check
    _
  $region15: #{base_conv_forward.2} parent=0 // pred_check_branch
    %932 = sbr.rel (0) target = $region17
  $region16: #{base_conv_forward.2} parent=0 // pred_region
    _
  $region17: #{base_conv_forward.2} parent=0 // pred_fallthru
    _
  // Predicated region
  $region18: #{base_conv_forward.2} parent=0 // pred_check
    _
  $region19: #{base_conv_forward.2} parent=0 // pred_check_branch
    %934 = sbr.rel (0) target = $region21
  $region20: #{base_conv_forward.2} parent=0 // pred_region
    _
  $region21: #{base_conv_forward.2} parent=0 // pred_fallthru
    _
  // Predicated region
  $region22: #{base_conv_forward.2} parent=0 // pred_check
    _
  $region23: #{base_conv_forward.2} parent=0 // pred_check_branch
    %936 = sbr.rel (0) target = $region25
  $region24: #{base_conv_forward.2} parent=0 // pred_region
    _
  $region25: #{base_conv_forward.2} parent=0 // pred_fallthru
    _

</llo_original>
